<compile_context>
chip_gen: v5e
topology: v5e:2x2
jax: 0.10.0
libtpu: 0.0.40
codegen_flags: <defaults>
</compile_context>

<pallas_src>
import functools

import numpy as np
import jax
import jax.numpy as jnp
from jax.experimental import pallas as pl
from jax.experimental.pallas import tpu as pltpu


# ---------------------------------------------------------------------------
# Glue: module __init__ logic (static, plain Python / numpy)
# ---------------------------------------------------------------------------
def _make_divisible(v, divisor, min_value=None):
    if min_value is None:
        min_value = divisor
    new_v = max(min_value, int(v + divisor / 2) // divisor * divisor)
    if new_v < 0.9 * v:
        new_v += divisor
    return new_v


def _build_index(in_channels, g, expansion):
    """Reproduces the channel-shuffle index construction from __init__."""
    if g != 1 and expansion:
        g = in_channels // g
    gc = in_channels // g
    idx = np.arange(in_channels).reshape(g, gc)
    idx = np.concatenate([idx[1:], idx[:1]], axis=0)      # rotate groups
    idx = np.concatenate([idx[:, 1:], idx[:, :1]], axis=1)  # rotate within group
    return tuple(int(i) for i in idx.reshape(-1))


def _perm_matrix(index, C, dtype=np.float32):
    """One-hot permutation matrix P with x2 = P @ x  (x2[i] = x[index[i]])."""
    P = np.zeros((C, C), dtype=dtype)
    P[np.arange(C), np.asarray(index)] = 1.0
    return P


# ---------------------------------------------------------------------------
# Coefficient stack (plain JAX): avg-pool -> FC -> HSigmoid -> rescale+offsets
# ---------------------------------------------------------------------------
def _coefficients(x, w1, b1, w2, b2, *, init_a, init_b, exp, out_channels):
    B = x.shape[0]
    y = jnp.mean(x.astype(jnp.float32), axis=(2, 3))           # (B, C)
    h = jnp.maximum(y @ w1.T + b1, 0.0)                        # ReLU
    y = h @ w2.T + b2                                          # (B, exp*oc)
    y = jnp.clip(y + 3.0, 0.0, 6.0) * (1.0 / 6.0)              # HSigmoid
    y = (y - 0.5) * 4.0
    y = y.reshape(B, exp, out_channels)
    if exp == 4:
        # PyTorch: a1 += init_a[0]; b1 += init_b[0]; a2 += init_b[1]; b2 += init_b[1]
        offs = jnp.asarray([init_a[0], init_b[0], init_b[1], init_b[1]],
                           dtype=jnp.float32)
    else:
        offs = jnp.asarray([init_a[0], init_b[0]], dtype=jnp.float32)
    return y + offs[None, :, None]                             # (B, exp, oc)


# ---------------------------------------------------------------------------
# Main Pallas kernel: memory-bound elementwise fusion over (B-tiles, HW-tiles)
# ---------------------------------------------------------------------------
def fused_kernel(coef_ref, p_ref, x_ref, o_ref, *, exp, tb):
    # coef_ref: (tB, exp, C, 1)   p_ref: (C, C)   x_ref/o_ref: (tB, C, thw)
    p = p_ref[...]
    for b in range(tb):                      # static unroll over batch tile
        xb = x_ref[b]                                           # (C, thw)
        # Channel shuffle as a permutation matmul on the MXU; exact for 0/1 P.
        x2 = jnp.dot(p, xb, preferred_element_type=jnp.float32).astype(xb.dtype)
        a1 = coef_ref[b, 0]                                     # (C, 1)
        b1 = coef_ref[b, 1]
        z1 = xb * a1 + x2 * b1
        if exp == 4:
            a2 = coef_ref[b, 2]
            b2 = coef_ref[b, 3]
            z2 = xb * a2 + x2 * b2
            out = jnp.maximum(z1, z2)
        else:  # exp == 2
            out = z1
        o_ref[b] = out.astype(o_ref.dtype)


# ---------------------------------------------------------------------------
# Wrapper
# ---------------------------------------------------------------------------
def dy_shift_max(x, w1, b1, w2, b2, *, index, init_a, init_b, exp, out_channels):
    B, C, H, W = x.shape
    HW = H * W
    assert C == out_channels, "DYShiftMax kernel assumes in_channels == out_channels"
    dtype_bytes = jnp.dtype(x.dtype).itemsize

    # Per-batch, per-channel coefficients in plain JAX (tiny), cast to x dtype
    coef = _coefficients(x, w1, b1, w2, b2, init_a=init_a, init_b=init_b,
                         exp=exp, out_channels=out_channels)
    coef = coef[..., None].astype(x.dtype)                      # (B, exp, C, 1)

    xf = x.reshape(B, C, HW)
    P = jnp.asarray(_perm_matrix(index, C), dtype=x.dtype)

    # ---- tile selection -----------------------------------------------------
    MAX_T = 16384                              # lane-tile size when HW is tiled
    thw = HW if HW <= MAX_T else MAX_T         # full dim => no 128 constraint
    n_hw = pl.cdiv(HW, thw)                    # ragged last tile masked by Pallas

    C_pad = ((C + 7) // 8) * 8                 # sublane-padded channel count
    per_b_block = C_pad * thw
    # Per batch element per grid step: x (2 bufs) + out (2 bufs) in x dtype,
    # plus ~2 f32-sized in-kernel temporaries (x2, z) — conservative.
    per_b_vmem = per_b_block * dtype_bytes * 4 + per_b_block * 4 * 2

    VMEM_BUDGET = 40 << 20                     # keeps headroom on v7x (64 MiB)
    TARGET_READ_BYTES = 4 << 20                # ~8 MiB read+write per grid step
    tb_vmem = max(1, VMEM_BUDGET // per_b_vmem)
    tb_target = max(1, TARGET_READ_BYTES // (per_b_block * dtype_bytes))
    tB = int(max(1, min(B, tb_vmem, tb_target, 16)))
    nB = pl.cdiv(B, tB)
    # Keep at least 2 grid steps when possible so both v7x TensorCores get work.
    if nB * n_hw == 1 and B > 1:
        tB = -(-B // 2)
        nB = pl.cdiv(B, tB)

    vmem_limit = int(min(56 << 20, max(16 << 20, 2 * tB * per_b_vmem)))

    flops = 2 * C * C * HW * B + (7 if exp == 4 else 3) * B * C * HW
    bytes_accessed = (2 * B * C * HW + C * C + B * exp * C) * dtype_bytes
    cost = pl.CostEstimate(flops=flops, transcendentals=0,
                           bytes_accessed=bytes_accessed)

    out = pl.pallas_call(
        functools.partial(fused_kernel, exp=exp, tb=tB),
        out_shape=jax.ShapeDtypeStruct((B, C, HW), x.dtype),
        grid_spec=pltpu.PrefetchScalarGridSpec(
            num_scalar_prefetch=0,
            grid=(nB, n_hw),
            in_specs=[
                pl.BlockSpec((tB, exp, C, 1), lambda b, t: (b, 0, 0, 0)),
                pl.BlockSpec((C, C), lambda b, t: (0, 0)),
                pl.BlockSpec((tB, C, thw), lambda b, t: (b, 0, t)),
            ],
            out_specs=pl.BlockSpec((tB, C, thw), lambda b, t: (b, 0, t)),
        ),
        compiler_params=pltpu.CompilerParams(
            dimension_semantics=("parallel", "parallel"),
            vmem_limit_bytes=vmem_limit),
        cost_estimate=cost,
    )(coef, P, xf)

    return out.reshape(B, C, H, W)


# ---------------------------------------------------------------------------
# Pure-JAX reference (mirrors the PyTorch module exactly)
# ---------------------------------------------------------------------------
def dy_shift_max_ref(x, w1, b1, w2, b2, *, index, init_a, init_b, exp, out_channels):
    y = x.mean(axis=(2, 3))                                  # (B, C)
    h = jnp.maximum(y @ w1.T + b1, 0.0)
    y = h @ w2.T + b2
    y = jnp.clip(y + 3.0, 0.0, 6.0) / 6.0
    y = (y - 0.5) * 4.0
    y = y[:, :, None, None]
    x2 = x[:, jnp.array(index), :, :]
    oc = out_channels
    if exp == 4:
        a1 = y[:, 0 * oc:1 * oc] + init_a[0]
        b1_ = y[:, 1 * oc:2 * oc] + init_b[0]
        a2 = y[:, 2 * oc:3 * oc] + init_b[1]   # matches PyTorch: a2 += init_b[1]
        b2_ = y[:, 3 * oc:4 * oc] + init_b[1]
        return jnp.maximum(x * a1 + x2 * b1_, x * a2 + x2 * b2_)
    a1 = y[:, 0 * oc:1 * oc] + init_a[0]
    b1_ = y[:, 1 * oc:2 * oc] + init_b[0]
    return x * a1 + x2 * b1_


if __name__ == "__main__":
    # Module config (as used in MicroNet: in == out channels, act_relu=True).
    B, H, W = 2, 16, 16
    in_channels = out_channels = 12
    g, reduction, expansion = 6, 4, False
    act_relu = True
    exp = 4 if act_relu else 2
    init_a = (1.0, 0.0)
    init_b = (0.0, 0.5)

    squeeze = _make_divisible(in_channels // reduction, 4)   # -> 4
    index = _build_index(in_channels, g, expansion)

    key = jax.random.PRNGKey(0)
    kx, k1, k2, k3, k4 = jax.random.split(key, 5)
    x = jax.random.normal(kx, (B, in_channels, H, W), dtype=jnp.float32)
    # fc params, PyTorch Linear convention: weight (out_features, in_features)
    w1 = 0.3 * jax.random.normal(k1, (squeeze, in_channels), dtype=jnp.float32)
    b1 = 0.1 * jax.random.normal(k2, (squeeze,), dtype=jnp.float32)
    w2 = 0.3 * jax.random.normal(k3, (out_channels * exp, squeeze), dtype=jnp.float32)
    b2 = 0.1 * jax.random.normal(k4, (out_channels * exp,), dtype=jnp.float32)

    out = dy_shift_max(x, w1, b1, w2, b2, index=index, init_a=init_a,
                       init_b=init_b, exp=exp, out_channels=out_channels)
    out = jax.block_until_ready(out)

    ref = dy_shift_max_ref(x, w1, b1, w2, b2, index=index, init_a=init_a,
                           init_b=init_b, exp=exp, out_channels=out_channels)
    np.testing.assert_allclose(np.asarray(out), np.asarray(ref),
                               rtol=1e-3, atol=1e-3)
    print("KERNEL_OK")
</pallas_src>

<mosaic_0001>
module attributes {stable_mosaic.version = 11 : i64} {
  func.func @fused_kernel(%arg0: i32, %arg1: i32, %arg2: memref<1x4x12x1xf32, #tpu.memory_space<vmem>>, %arg3: memref<12x12xf32, #tpu.memory_space<vmem>>, %arg4: memref<1x12x256xf32, #tpu.memory_space<vmem>>, %arg5: memref<1x12x256xf32, #tpu.memory_space<vmem>>) attributes {dimension_semantics = [#tpu.dimension_semantics<parallel>, #tpu.dimension_semantics<parallel>], iteration_bounds = array<i64: 2, 1>, scalar_prefetch = 0 : i64, scratch_operands = 0 : i64, tpu.core_type = #tpu.core_type<tc>, window_params = [{transform_indices = @transform_0, window_bounds = array<i64: 1, 4, 12, 1>}, {pipeline_mode = #tpu.pipeline_mode<synchronous>, transform_indices = @transform_1, window_bounds = array<i64: 12, 12>}, {transform_indices = @transform_2, window_bounds = array<i64: 1, 12, 256>}, {transform_indices = @transform_3, window_bounds = array<i64: 1, 12, 256>}]} {
    %c0 = arith.constant 0 : index
    %c0_0 = arith.constant 0 : index
    %0 = vector.load %arg3[%c0, %c0_0] : memref<12x12xf32, #tpu.memory_space<vmem>>, vector<12x12xf32>
    %c0_1 = arith.constant 0 : index
    %c0_2 = arith.constant 0 : index
    %c0_3 = arith.constant 0 : index
    %1 = vector.load %arg4[%c0_1, %c0_2, %c0_3] : memref<1x12x256xf32, #tpu.memory_space<vmem>>, vector<1x12x256xf32>
    %2 = vector.shape_cast %1 : vector<1x12x256xf32> to vector<12x256xf32>
    %cst = arith.constant dense<0.000000e+00> : vector<12x256xf32>
    %3 = tpu.matmul %0, %2, %cst {dimension_numbers = #tpu.dot_dimension_numbers<[1], [0], [0], [1], [0, 0, 1, 1], [], []>} : vector<12x12xf32>, vector<12x256xf32>, vector<12x256xf32> -> vector<12x256xf32>
    %c0_4 = arith.constant 0 : index
    %c0_5 = arith.constant 0 : index
    %c0_6 = arith.constant 0 : index
    %c0_7 = arith.constant 0 : index
    %4 = vector.load %arg2[%c0_4, %c0_5, %c0_6, %c0_7] : memref<1x4x12x1xf32, #tpu.memory_space<vmem>>, vector<1x1x12x1xf32>
    %5 = vector.shape_cast %4 : vector<1x1x12x1xf32> to vector<12x1xf32>
    %c0_8 = arith.constant 0 : index
    %c1 = arith.constant 1 : index
    %c0_9 = arith.constant 0 : index
    %c0_10 = arith.constant 0 : index
    %6 = vector.load %arg2[%c0_8, %c1, %c0_9, %c0_10] : memref<1x4x12x1xf32, #tpu.memory_space<vmem>>, vector<1x1x12x1xf32>
    %7 = vector.shape_cast %6 : vector<1x1x12x1xf32> to vector<12x1xf32>
    %8 = vector.broadcast %5 : vector<12x1xf32> to vector<12x256xf32>
    %9 = arith.mulf %2, %8 : vector<12x256xf32>
    %10 = vector.broadcast %7 : vector<12x1xf32> to vector<12x256xf32>
    %11 = arith.mulf %3, %10 : vector<12x256xf32>
    %12 = arith.addf %9, %11 : vector<12x256xf32>
    %c0_11 = arith.constant 0 : index
    %c2 = arith.constant 2 : index
    %c0_12 = arith.constant 0 : index
    %c0_13 = arith.constant 0 : index
    %13 = vector.load %arg2[%c0_11, %c2, %c0_12, %c0_13] : memref<1x4x12x1xf32, #tpu.memory_space<vmem>>, vector<1x1x12x1xf32>
    %14 = vector.shape_cast %13 : vector<1x1x12x1xf32> to vector<12x1xf32>
    %c0_14 = arith.constant 0 : index
    %c3 = arith.constant 3 : index
    %c0_15 = arith.constant 0 : index
    %c0_16 = arith.constant 0 : index
    %15 = vector.load %arg2[%c0_14, %c3, %c0_15, %c0_16] : memref<1x4x12x1xf32, #tpu.memory_space<vmem>>, vector<1x1x12x1xf32>
    %16 = vector.shape_cast %15 : vector<1x1x12x1xf32> to vector<12x1xf32>
    %17 = vector.broadcast %14 : vector<12x1xf32> to vector<12x256xf32>
    %18 = arith.mulf %2, %17 : vector<12x256xf32>
    %19 = vector.broadcast %16 : vector<12x1xf32> to vector<12x256xf32>
    %20 = arith.mulf %3, %19 : vector<12x256xf32>
    %21 = arith.addf %18, %20 : vector<12x256xf32>
    %22 = arith.maximumf %12, %21 : vector<12x256xf32>
    %c0_17 = arith.constant 0 : index
    %c0_18 = arith.constant 0 : index
    %c0_19 = arith.constant 0 : index
    %23 = vector.load %arg5[%c0_17, %c0_18, %c0_19] : memref<1x12x256xf32, #tpu.memory_space<vmem>>, vector<1x12x256xf32>
    %24 = vector.shape_cast %23 : vector<1x12x256xf32> to vector<12x256xf32>
    %25 = vector.shape_cast %22 : vector<12x256xf32> to vector<1x12x256xf32>
    tpu.vector_store %arg5[%c0_17, %c0_18, %c0_19], %25 {strides = array<i32>} : memref<1x12x256xf32, #tpu.memory_space<vmem>>, vector<1x12x256xf32>,
    return
  }
  func.func @transform_0(%arg0: i32, %arg1: i32) -> (i32, i32, i32, i32) {
    %c0_i32 = arith.constant 0 : i32
    %c0_i32_0 = arith.constant 0 : i32
    %c0_i32_1 = arith.constant 0 : i32
    %c0_i32_2 = arith.constant 0 : i32
    return %arg0, %c0_i32, %c0_i32_0, %c0_i32_1 : i32, i32, i32, i32
  }
  func.func @transform_1(%arg0: i32, %arg1: i32) -> (i32, i32) {
    %c0_i32 = arith.constant 0 : i32
    %c0_i32_0 = arith.constant 0 : i32
    %c0_i32_1 = arith.constant 0 : i32
    return %c0_i32, %c0_i32_0 : i32, i32
  }
  func.func @transform_2(%arg0: i32, %arg1: i32) -> (i32, i32, i32) {
    %c0_i32 = arith.constant 0 : i32
    %c0_i32_0 = arith.constant 0 : i32
    return %arg0, %c0_i32, %arg1 : i32, i32, i32
  }
  func.func @transform_3(%arg0: i32, %arg1: i32) -> (i32, i32, i32) {
    %c0_i32 = arith.constant 0 : i32
    %c0_i32_0 = arith.constant 0 : i32
    return %arg0, %c0_i32, %arg1 : i32, i32, i32
  }
}

</mosaic_0001>

<llo_original>
// kernel: tpu_custom_call.1
$region0: #{tpu_custom_call.1}
  #allocation0 [shape = 'u32[]', space=smem, size = 0x4, offset = 0x4, fixed_abs, tag = 'smem constant byte address 0x4 - core index']
  #allocation1 [shape = 'u32[72,128]{1,0:T(1,128)}', space=vmem, size = 0x9000, scoped, tag = 'internal scratch']
  %s0 = inlined_call_operand.vmem [shape: f32[2,4,12,1], index: 0, kind: input, shape index: {}]
  %s1 = inlined_call_operand.vmem [shape: f32[12,12], index: 1, kind: input, shape index: {}]
  %s2 = inlined_call_operand.vmem [shape: f32[2,12,256], index: 2, kind: input, shape index: {}]
  %s3 = inlined_call_operand.vmem [shape: f32[2,12,256], index: 3, kind: output, shape index: {}]
  %s4 = sld [smem:[#allocation0]]
  $region45: #{tpu_custom_call.1} parent=0
    _
  %s6 = ssub.s32 1, %s4
  %s7 = scalar_select 0, %s6, %s4
  loop: start=0, step=1, limit=4
  $region2: #{tpu_custom_call.1} parent=0 // loop_pre_header
    _
  $region3: #{tpu_custom_call.1} parent=0 // loop_header
    %s9 = sphi 0, %s13
    %p10 = scmp.ge.s32.totalorder %s9, 4
    %s16 = sphi 0, %s28
    %s17 = sphi 0, %s24
    %s18 = sphi 0, %s16
    %s19 = sphi 0, %s17
    %s20 = sphi 0, %s18
    %s21 = sphi 0, %s19
    %s31 = sphi 0, %s33
    %s34 = sphi 0, %s31
    %s35 = sphi 0, %s34
    %s51 = sphi 0, %s35
    %s55 = sphi 0, %s55
    %s57 = sphi 0, %s55
    %s58 = sphi 0, %s57
    %s72 = sphi 0, %s58
    %s80 = sphi 0, %s82
    %s83 = sphi 0, %s80
    %s84 = sphi 0, %s83
    %s100 = sphi 0, %s84
    %s108 = sphi 0, %s110
    %s111 = sphi 0, %s108
    %s112 = sphi 0, %s111
    %s128 = sphi 0, %s112
  $region4: #{tpu_custom_call.1} parent=0 // loop_header_branch
    %12 = sbr.rel (%p10) target = $region8
  $region5: #{tpu_custom_call.1} parent=0 // loop_body
    %s14 = ssub.s32 %s9, 1
    %s15 = ssub.s32 %s9, 2
    %s22 = sadd.s32 1, %s17
    %p23 = scmp.ge.s32.totalorder %s22, 1
    %s24 = scalar_select %p23, 0, %s22
    %s25 = sadd.s32 1, %s16
    %s26 = scalar_select %p23, %s25, %s16
    %p27 = scmp.ge.s32.totalorder %s26, 2
    %s28 = scalar_select %p27, 0, %s26
    %s29 = ssub.s32 %s16, %s28
    %p30 = scmp.eq.s32.totalorder %s29, 0
    %s32 = sadd.s32 %s31, 1
    %s33 = scalar_select %p30, %s31, %s32
    %p36 = pneg %p30
    %p37 = scmp.eq.s32.totalorder %s9, 1
    %p38 = por %p36, %p37
    %p39 = scmp.ne.s32.totalorder %s31, %s34
    %p40 = scmp.eq.s32.totalorder %s9, 0
    %p41 = por %p39, %p40
    %p42 = scmp.ne.s32.totalorder %s31, %s34
    %p43 = scmp.eq.s32.totalorder %s14, 1
    %p44 = por %p42, %p43
    %p45 = scmp.ne.s32.totalorder %s34, %s35
    %p46 = scmp.eq.s32.totalorder %s14, 0
    %p47 = por %p45, %p46
    %p48 = scmp.ne.s32.totalorder %s34, %s35
    %p49 = scmp.eq.s32.totalorder %s15, 1
    %p50 = por %p48, %p49
    %p52 = scmp.ne.s32.totalorder %s35, %s51
    %p53 = scmp.eq.s32.totalorder %s15, 0
    %p54 = por %p52, %p53
    %s56 = sadd.s32 %s55, 1
    %p59 = scmp.eq.s32.totalorder %s9, 1
    %p60 = scmp.ne.s32.totalorder %s55, %s57
    %p61 = scmp.eq.s32.totalorder %s9, 0
    %p62 = por %p60, %p61
    %p63 = scmp.ne.s32.totalorder %s55, %s57
    %p64 = scmp.eq.s32.totalorder %s14, 1
    %p65 = por %p63, %p64
    %p66 = scmp.ne.s32.totalorder %s57, %s58
    %p67 = scmp.eq.s32.totalorder %s14, 0
    %p68 = por %p66, %p67
    %p69 = scmp.ne.s32.totalorder %s57, %s58
    %p70 = scmp.eq.s32.totalorder %s15, 1
    %p71 = por %p69, %p70
    %p73 = scmp.ne.s32.totalorder %s58, %s72
    %p74 = scmp.eq.s32.totalorder %s15, 0
    %p75 = por %p73, %p74
    %s76 = ssub.s32 %s16, %s28
    %s77 = ssub.s32 %s17, %s24
    %s78 = sor.u32 %s76, %s77
    %p79 = scmp.eq.s32.totalorder %s78, 0
    %s81 = sadd.s32 %s80, 1
    %s82 = scalar_select %p79, %s80, %s81
    %p85 = pneg %p79
    %p86 = scmp.eq.s32.totalorder %s9, 1
    %p87 = por %p85, %p86
    %p88 = scmp.ne.s32.totalorder %s80, %s83
    %p89 = scmp.eq.s32.totalorder %s9, 0
    %p90 = por %p88, %p89
    %p91 = scmp.ne.s32.totalorder %s80, %s83
    %p92 = scmp.eq.s32.totalorder %s14, 1
    %p93 = por %p91, %p92
    %p94 = scmp.ne.s32.totalorder %s83, %s84
    %p95 = scmp.eq.s32.totalorder %s14, 0
    %p96 = por %p94, %p95
    %p97 = scmp.ne.s32.totalorder %s83, %s84
    %p98 = scmp.eq.s32.totalorder %s15, 1
    %p99 = por %p97, %p98
    %p101 = scmp.ne.s32.totalorder %s84, %s100
    %p102 = scmp.eq.s32.totalorder %s15, 0
    %p103 = por %p101, %p102
    %s104 = ssub.s32 %s16, %s28
    %s105 = ssub.s32 %s17, %s24
    %s106 = sor.u32 %s104, %s105
    %p107 = scmp.eq.s32.totalorder %s106, 0
    %s109 = sadd.s32 %s108, 1
    %s110 = scalar_select %p107, %s108, %s109
    %p113 = pneg %p107
    %p114 = scmp.eq.s32.totalorder %s9, 1
    %p115 = por %p113, %p114
    %p116 = scmp.ne.s32.totalorder %s108, %s111
    %p117 = scmp.eq.s32.totalorder %s9, 0
    %p118 = por %p116, %p117
    %p119 = scmp.ne.s32.totalorder %s108, %s111
    %p120 = scmp.eq.s32.totalorder %s14, 1
    %p121 = por %p119, %p120
    %p122 = scmp.ne.s32.totalorder %s111, %s112
    %p123 = scmp.eq.s32.totalorder %s14, 0
    %p124 = por %p122, %p123
    %p125 = scmp.ne.s32.totalorder %s111, %s112
    %p126 = scmp.eq.s32.totalorder %s15, 1
    %p127 = por %p125, %p126
    %p129 = scmp.ne.s32.totalorder %s112, %s128
    %p130 = scmp.eq.s32.totalorder %s15, 0
    %p131 = por %p129, %p130
    %p132 = scmp.le.s32.totalorder 1, %s9
    %p133 = scmp.lt.s32.totalorder %s9, 3
    %p134 = pnand %p132, %p133
    %p135 = pneg %p134
    // Predicated region
    $region9: #{tpu_custom_call.1} parent=5 // pred_check
      _
    $region10: #{tpu_custom_call.1} parent=5 // pred_check_branch
      %137 = sbr.rel (%p134) target = $region12
    $region11: #{tpu_custom_call.1} parent=5 // pred_region
      %s138 = ssub.s32 %s9, 1
      // Predicated region
      $region13: #{tpu_custom_call.1} parent=11 // pred_check
        %p139 = pneg %p68
      $region14: #{tpu_custom_call.1} parent=11 // pred_check_branch
        %141 = sbr.rel (%p139) target = $region16
      $region15: #{tpu_custom_call.1} parent=11 // pred_region
        _
      $region16: #{tpu_custom_call.1} parent=11 // pred_fallthru
        _
    $region12: #{tpu_custom_call.1} parent=5 // pred_fallthru
      _
    %p142 = scmp.lt.s32.totalorder %s9, 2
    // Predicated region
    $region17: #{tpu_custom_call.1} parent=5 // pred_check
      %p143 = pneg %p142
    $region18: #{tpu_custom_call.1} parent=5 // pred_check_branch
      %145 = sbr.rel (%p143) target = $region20
    $region19: #{tpu_custom_call.1} parent=5 // pred_region
      // Predicated region
      $region21: #{tpu_custom_call.1} parent=19 // pred_check
        %p146 = pneg %p41
      $region22: #{tpu_custom_call.1} parent=19 // pred_check_branch
        %148 = sbr.rel (%p146) target = $region24
      $region23: #{tpu_custom_call.1} parent=19 // pred_region
        %p149 = scmp.lt.s32.totalorder %s16, 1
        %s150 = scalar_select %p149, %s16, 1
        %s151 = smul.addr %s150, 8
        %s152 = smul.addr %s151, 8
        %s153 = scalar_lea.vmem %s0, %s152
      $region24: #{tpu_custom_call.1} parent=19 // pred_fallthru
        _
      // Predicated region
      $region25: #{tpu_custom_call.1} parent=19 // pred_check
        %p154 = pneg %p90
      $region26: #{tpu_custom_call.1} parent=19 // pred_check_branch
        %156 = sbr.rel (%p154) target = $region28
      $region27: #{tpu_custom_call.1} parent=19 // pred_region
        %s157 = smul.u32 2, %s17
        %p158 = scmp.lt.s32.totalorder %s16, 1
        %s159 = scalar_select %p158, %s16, 1
        %p160 = scmp.lt.s32.totalorder %s157, 1
        %s161 = scalar_select %p160, %s157, 1
        %s162 = smul.addr %s159, 4
        %s163 = sadd.s32 %s161, %s162
        %s164 = smul.addr %s163, 8
        %s165 = scalar_lea.vmem %s2, %s164
        %s166 = smul.u32 2, %s17
      $region28: #{tpu_custom_call.1} parent=19 // pred_fallthru
        _
    $region20: #{tpu_custom_call.1} parent=5 // pred_fallthru
      _
    %p167 = scmp.le.s32.totalorder 1, %s9
    %p168 = scmp.lt.s32.totalorder %s9, 3
    %p169 = pnand %p167, %p168
    %p170 = pneg %p169
    // Predicated region
    $region29: #{tpu_custom_call.1} parent=5 // pred_check
      _
    $region30: #{tpu_custom_call.1} parent=5 // pred_check_branch
      %172 = sbr.rel (%p169) target = $region32
    $region31: #{tpu_custom_call.1} parent=5 // pred_region
      %s173 = ssub.s32 %s9, 1
      %p174 = scmp.lt.s32.totalorder %s18, 1
      %s175 = scalar_select %p174, %s18, 1
      %s176 = smul.addr %s175, 8
      %s177 = smul.addr %s176, 8
      %s178 = scalar_lea.vmem %s0, %s177
      %p179 = pneg %p47
      %p180 = pneg %p44
      %p181 = pneg %p68
      %p182 = pneg %p65
      %s183 = smul.u32 2, %s19
      %p184 = scmp.lt.s32.totalorder %s18, 1
      %s185 = scalar_select %p184, %s18, 1
      %p186 = scmp.lt.s32.totalorder %s183, 1
      %s187 = scalar_select %p186, %s183, 1
      %s188 = smul.addr %s185, 4
      %s189 = sadd.s32 %s187, %s188
      %s190 = smul.addr %s189, 8
      %s191 = scalar_lea.vmem %s2, %s190
      %p192 = pneg %p96
      %p193 = pneg %p93
      %p194 = pneg %p124
      %p195 = pneg %p121
      %s196 = smul.u32 2, %s19
      %p197 = scmp.lt.s32.totalorder %s18, 1
      %s198 = scalar_select %p197, %s18, 1
      %p199 = scmp.lt.s32.totalorder %s196, 1
      %s200 = scalar_select %p199, %s196, 1
      %s201 = smul.addr %s198, 4
      %s202 = sadd.s32 %s200, %s201
      %s203 = smul.addr %s202, 8
      %s204 = scalar_lea.vmem %s3, %s203
      %p205 = scmp.lt.s32.totalorder %s18, 1
      %s206 = scalar_select %p205, %s18, 1
      %s207 = smul.addr %s206, 8
      %s208 = smul.addr %s207, 8
      %s209 = scalar_lea.vmem %s0, %s208
      %s210 = smul.u32 2, %s19
      %p211 = scmp.lt.s32.totalorder %s18, 1
      %s212 = scalar_select %p211, %s18, 1
      %p213 = scmp.lt.s32.totalorder %s210, 1
      %s214 = scalar_select %p213, %s210, 1
      %s215 = smul.addr %s212, 4
      %s216 = sadd.s32 %s214, %s215
      %s217 = smul.addr %s216, 8
      %s218 = scalar_lea.vmem %s2, %s217
      %s219 = smul.u32 2, %s19
      %s220 = smul.u32 2, %s19
      %p221 = scmp.lt.s32.totalorder %s18, 1
      %s222 = scalar_select %p221, %s18, 1
      %p223 = scmp.lt.s32.totalorder %s220, 1
      %s224 = scalar_select %p223, %s220, 1
      %s225 = smul.addr %s222, 4
      %s226 = sadd.s32 %s224, %s225
      %s227 = smul.addr %s226, 8
      %s228 = scalar_lea.vmem %s3, %s227
      %s229 = smul.u32 2, %s19
      %v230 = vld [vmem:[%s1] sm:$0xff]
      %v231 = vld [vmem:[%s1 + $0x8] sm:$0xf]
      %v232 = vld [vmem:[%s218] sm:$0xff]
      %v233 = vld [vmem:[%s218 + $0x8] sm:$0xff]
      %v234 = vld [vmem:[%s218 + $0x10] sm:$0xf]
      %v235 = vld [vmem:[%s218 + $0x18] sm:$0xf]
      %vm236 = vcmask 97280
      %v238 = vsel %vm236, %v230, 0
      %v241 = vsel %vm236, %v231, 0
      %vm243 = vcmask 1043456
      %v245 = vsel %vm243, %v234, 0
      %v248 = vsel %vm243, %v235, 0
      %250 = vmatpush.msra.mxu0 0.0
      %251 = vmatpush.msra.mxu0 0.0
      %252 = vmatpush.msra.mxu0 0.0
      %253 = vmatpush.msra.mxu0 0.0
      %254 = vmatpush.msra.mxu0 0.0
      %255 = vmatpush.msra.mxu0 0.0
      %256 = vmatpush.msra.mxu0 0.0
      %257 = vmatpush.msra.mxu0 0.0
      %258 = vmatpush.msra.mxu0 0.0
      %259 = vmatpush.msra.mxu0 0.0
      %260 = vmatpush.msra.mxu0 0.0
      %261 = vmatpush.msra.mxu0 0.0
      %262 = vmatpush.msra.mxu0 0.0
      %263 = vmatpush.msra.mxu0 0.0
      %264 = vmatpush.msra.mxu0 %v245
      %265 = vmatpush.msra.mxu0 %v232
      %266 = vmatmul.f32.gmra.mxu0 %v238
      %v267 = vpop.f32.mrf.mxu0
      %v268 = vadd.f32 0.0, %v267
      %269 = vmatmul.f32.gmra.mxu0 %v241
      %v270 = vpop.f32.mrf.mxu0
      %v271 = vadd.f32 0.0, %v270
      %272 = vdwg.mxu0
      %273 = vmatpush.msra.mxu0 0.0
      %274 = vmatpush.msra.mxu0 0.0
      %275 = vmatpush.msra.mxu0 0.0
      %276 = vmatpush.msra.mxu0 0.0
      %277 = vmatpush.msra.mxu0 0.0
      %278 = vmatpush.msra.mxu0 0.0
      %279 = vmatpush.msra.mxu0 0.0
      %280 = vmatpush.msra.mxu0 0.0
      %281 = vmatpush.msra.mxu0 0.0
      %282 = vmatpush.msra.mxu0 0.0
      %283 = vmatpush.msra.mxu0 0.0
      %284 = vmatpush.msra.mxu0 0.0
      %285 = vmatpush.msra.mxu0 0.0
      %286 = vmatpush.msra.mxu0 0.0
      %287 = vmatpush.msra.mxu0 %v248
      %288 = vmatpush.msra.mxu0 %v233
      %289 = vmatmul.f32.gmra.mxu0 %v238
      %v290 = vpop.f32.mrf.mxu0
      %v291 = vadd.f32 0.0, %v290
      %292 = vmatmul.f32.gmra.mxu0 %v241
      %v293 = vpop.f32.mrf.mxu0
      %v294 = vadd.f32 0.0, %v293
      %295 = vdwg.mxu0
      %v296 = vld [vmem:[%s209] sm:$0xff]
      %v297 = vld [vmem:[%s209 + $0x8] sm:$0xf]
      %s298 = scalar_lea.vmem %s209, 16
      %v299 = vld [vmem:[%s298] sm:$0xff]
      %v300 = vld [vmem:[%s298 + $0x8] sm:$0xf]
      %302 = vset.pattern.permute.xlu0 0
      %303 = vperm.xlu0 %302, %v296
      %v304 = vpop.permute.xlu0 %303
      %307 = vset.pattern.permute.xlu0 0
      %308 = vperm.xlu0 %307, %v297
      %v309 = vpop.permute.xlu0 %308
      %v311 = vmul.f32 %v232, %v304
      %v312 = vmul.f32 %v233, %v304
      %v313 = vmul.f32 %v234, %v309
      %v314 = vmul.f32 %v235, %v309
      %316 = vset.pattern.permute.xlu0 0
      %317 = vperm.xlu0 %316, %v299
      %v318 = vpop.permute.xlu0 %317
      %321 = vset.pattern.permute.xlu0 0
      %322 = vperm.xlu0 %321, %v300
      %v323 = vpop.permute.xlu0 %322
      %v325 = vmul.f32 %v268, %v318
      %v326 = vmul.f32 %v291, %v318
      %v327 = vmul.f32 %v271, %v323
      %v328 = vmul.f32 %v294, %v323
      %v329 = vadd.f32 %v311, %v325
      %v330 = vadd.f32 %v312, %v326
      %v331 = vadd.f32 %v313, %v327
      %v332 = vadd.f32 %v314, %v328
      %s333 = scalar_lea.vmem %s209, 32
      %v334 = vld [vmem:[%s333] sm:$0xff]
      %v335 = vld [vmem:[%s333 + $0x8] sm:$0xf]
      %s336 = scalar_lea.vmem %s209, 48
      %v337 = vld [vmem:[%s336] sm:$0xff]
      %v338 = vld [vmem:[%s336 + $0x8] sm:$0xf]
      %340 = vset.pattern.permute.xlu0 0
      %341 = vperm.xlu0 %340, %v334
      %v342 = vpop.permute.xlu0 %341
      %345 = vset.pattern.permute.xlu0 0
      %346 = vperm.xlu0 %345, %v335
      %v347 = vpop.permute.xlu0 %346
      %v349 = vmul.f32 %v232, %v342
      %v350 = vmul.f32 %v233, %v342
      %v351 = vmul.f32 %v234, %v347
      %v352 = vmul.f32 %v235, %v347
      %354 = vset.pattern.permute.xlu0 0
      %355 = vperm.xlu0 %354, %v337
      %v356 = vpop.permute.xlu0 %355
      %359 = vset.pattern.permute.xlu0 0
      %360 = vperm.xlu0 %359, %v338
      %v361 = vpop.permute.xlu0 %360
      %v363 = vmul.f32 %v268, %v356
      %v364 = vmul.f32 %v291, %v356
      %v365 = vmul.f32 %v271, %v361
      %v366 = vmul.f32 %v294, %v361
      %v367 = vadd.f32 %v349, %v363
      %v368 = vadd.f32 %v350, %v364
      %v369 = vadd.f32 %v351, %v365
      %v370 = vadd.f32 %v352, %v366
      %v371 = vmax.f32 %v329, %v367
      %v372 = vmax.f32 %v330, %v368
      %v373 = vmax.f32 %v331, %v369
      %v374 = vmax.f32 %v332, %v370
      %375 = vst [vmem:[%s228] sm:$0xff] %v371
      %376 = vst [vmem:[%s228 + $0x8] sm:$0xff] %v372
      %377 = vst [vmem:[%s228 + $0x10] sm:$0xf] %v373
      %378 = vst [vmem:[%s228 + $0x18] sm:$0xf] %v374
      %s379 = smul.u32 2, %s19
      %p380 = scmp.lt.s32.totalorder %s18, 1
      %s381 = scalar_select %p380, %s18, 1
      %p382 = scmp.lt.s32.totalorder %s379, 1
      %s383 = scalar_select %p382, %s379, 1
      %s384 = smul.addr %s381, 4
      %s385 = sadd.s32 %s383, %s384
      %s386 = smul.addr %s385, 8
      %s387 = scalar_lea.vmem %s3, %s386
      // Predicated region
      $region33: #{tpu_custom_call.1} parent=31 // pred_check
        %p388 = pneg %p121
      $region34: #{tpu_custom_call.1} parent=31 // pred_check_branch
        %390 = sbr.rel (%p388) target = $region36
      $region35: #{tpu_custom_call.1} parent=31 // pred_region
        %s391 = smul.u32 2, %s19
      $region36: #{tpu_custom_call.1} parent=31 // pred_fallthru
        _
    $region32: #{tpu_custom_call.1} parent=5 // pred_fallthru
      _
    %p392 = scmp.le.s32.totalorder 2, %s9
    // Predicated region
    $region37: #{tpu_custom_call.1} parent=5 // pred_check
      %p393 = pneg %p392
    $region38: #{tpu_custom_call.1} parent=5 // pred_check_branch
      %395 = sbr.rel (%p393) target = $region40
    $region39: #{tpu_custom_call.1} parent=5 // pred_region
      %s396 = ssub.s32 %s9, 2
      // Predicated region
      $region41: #{tpu_custom_call.1} parent=39 // pred_check
        %p397 = pneg %p127
      $region42: #{tpu_custom_call.1} parent=39 // pred_check_branch
        %399 = sbr.rel (%p397) target = $region44
      $region43: #{tpu_custom_call.1} parent=39 // pred_region
        %s400 = smul.u32 2, %s21
        %p401 = scmp.lt.s32.totalorder %s20, 1
        %s402 = scalar_select %p401, %s20, 1
        %p403 = scmp.lt.s32.totalorder %s400, 1
        %s404 = scalar_select %p403, %s400, 1
        %s405 = smul.addr %s402, 4
        %s406 = sadd.s32 %s404, %s405
        %s407 = smul.addr %s406, 8
        %s408 = scalar_lea.vmem %s3, %s407
      $region44: #{tpu_custom_call.1} parent=39 // pred_fallthru
        _
    $region40: #{tpu_custom_call.1} parent=5 // pred_fallthru
      _
  $region6: #{tpu_custom_call.1} parent=0 // loop_footer
    %s13 = sadd.s32 1, %s9
  $region7: #{tpu_custom_call.1} parent=0 // loop_footer_branch
    %8 = sbr.rel target = $region3
  $region8: #{tpu_custom_call.1} parent=0 // loop_exit
    _

</llo_original>
